<compile_context>
chip_gen: v7x
topology: tpu7x:2x2x1
jax: 0.10.0
libtpu: 0.0.40
codegen_flags: <defaults>
</compile_context>

<pallas_src>
import functools

import numpy as np
import jax
import jax.numpy as jnp
from jax.experimental import pallas as pl
from jax.experimental.pallas import tpu as pltpu


# ----------------------------------------------------------------------------
# Parameter / buffer construction (matches the PyTorch __init__)
# ----------------------------------------------------------------------------
def make_pe_table(d_model: int, max_len: int = 5000, dtype=jnp.float32):
    position = np.arange(0, max_len, dtype=np.float32)[:, None]              # (max_len, 1)
    div_term = np.exp(
        np.arange(0, d_model, 2, dtype=np.float32) * (-np.log(10000.0) / d_model)
    )                                                                         # (d_model/2,)
    pe = np.zeros((max_len, d_model), dtype=np.float32)
    pe[:, 0::2] = np.sin(position * div_term)
    pe[:, 1::2] = np.cos(position * div_term)
    return jnp.asarray(pe, dtype=dtype)


# ----------------------------------------------------------------------------
# Kernels
# ----------------------------------------------------------------------------
def _pe_add_kernel(x_ref, pe_ref, o_ref):
    # (rows, D) + (rows, D): layout-identical, single VPU add per vreg.
    o_ref[...] = x_ref[...] + pe_ref[...]


def _pe_add_dropout_kernel(x_ref, pe_ref, bits_ref, o_ref, *, threshold, scale):
    y = x_ref[...] + pe_ref[...]
    # Integer-threshold compare on raw uint32 bits: P(drop) = threshold / 2^32.
    keep = bits_ref[...] >= jnp.uint32(threshold)
    o_ref[...] = jnp.where(keep, y * jnp.asarray(scale, dtype=y.dtype),
                           jnp.zeros_like(y))


# ----------------------------------------------------------------------------
# Tiling / compiler-param helpers
# ----------------------------------------------------------------------------
def _row_tile(n_rows: int, per_row_bytes: int,
              budget_bytes: int = 12 * 1024 * 1024, max_rows: int = 2048) -> int:
    """Largest row tile (multiple of 8, capped) whose double-buffered working
    set fits the VMEM budget; falls back to the full row extent when small."""
    t = min(n_rows, max_rows, max(8, budget_bytes // max(per_row_bytes, 1)))
    if t >= n_rows:
        return n_rows                      # full extent always satisfies tiling rule
    return max(8, (t // 8) * 8)


def _call_kwargs(flops: int, bytes_accessed: int):
    kwargs = dict(cost_estimate=pl.CostEstimate(
        flops=flops, transcendentals=0, bytes_accessed=bytes_accessed))
    if jax.default_backend() == "tpu":
        # Only attach Mosaic-specific params when actually compiling for TPU.
        kwargs["compiler_params"] = pltpu.CompilerParams(
            dimension_semantics=("parallel",),       # megacore sharding on v7x
            vmem_limit_bytes=32 * 1024 * 1024)       # safe on v5e/v6e/v7x
    return kwargs


# ----------------------------------------------------------------------------
# Wrapper
# ----------------------------------------------------------------------------
def positional_encoding(x, pe_table, *, dropout_p=0.1, training=False, rng_key=None):
    """x: (S, B, D).  Returns x + pe[:S] (with inverted dropout if training)."""
    S, B, D = x.shape
    R = S * B
    itemsize = x.dtype.itemsize

    # Lane/sublane-dense 2-D slabs; pe pre-broadcast to x's layout and dtype.
    x2 = x.reshape(R, D)
    pe2 = jnp.broadcast_to(
        pe_table[:S].astype(x.dtype)[:, None, :], (S, B, D)).reshape(R, D)

    use_dropout = training and dropout_p > 0.0

    # Bytes touched per output row (double-buffered streams): x + pe + out (+ bits).
    per_row_bytes = 2 * (3 * D * itemsize + (4 * D if use_dropout else 0))
    tR = _row_tile(R, per_row_bytes)
    grid = (pl.cdiv(R, tR),)
    row_spec = pl.BlockSpec((tR, D), lambda i: (i, 0))
    out_shape = jax.ShapeDtypeStruct((R, D), x.dtype)

    if not use_dropout:
        out2 = pl.pallas_call(
            _pe_add_kernel,
            out_shape=out_shape,
            grid=grid,
            in_specs=[row_spec, row_spec],
            out_specs=row_spec,
            **_call_kwargs(flops=R * D, bytes_accessed=3 * R * D * itemsize),
        )(x2, pe2)
        return out2.reshape(S, B, D)

    if rng_key is None:
        rng_key = jax.random.PRNGKey(0)
    bits = jax.random.bits(rng_key, (R, D), dtype=jnp.uint32)
    threshold = min(int(round(float(dropout_p) * 4294967296.0)), 4294967295)
    scale = 1.0 / (1.0 - float(dropout_p))

    kernel = functools.partial(_pe_add_dropout_kernel,
                               threshold=threshold, scale=scale)
    out2 = pl.pallas_call(
        kernel,
        out_shape=out_shape,
        grid=grid,
        in_specs=[row_spec, row_spec, row_spec],
        out_specs=row_spec,
        **_call_kwargs(flops=3 * R * D,
                       bytes_accessed=(3 * itemsize + 4) * R * D),
    )(x2, pe2, bits)
    return out2.reshape(S, B, D)


# ----------------------------------------------------------------------------
# Main
# ----------------------------------------------------------------------------
if __name__ == "__main__":
    SEQ, BATCH, D_MODEL = 8, 2, 32
    MAX_LEN = 64  # real module uses 5000; only the first SEQ rows matter

    key = jax.random.PRNGKey(0)
    kx, kdrop = jax.random.split(key)
    x = jax.random.normal(kx, (SEQ, BATCH, D_MODEL), dtype=jnp.float32)
    pe_table = make_pe_table(D_MODEL, max_len=MAX_LEN)

    # --- Eval-mode forward (dropout = identity), matches PyTorch module.eval() ---
    out = positional_encoding(x, pe_table, dropout_p=0.1, training=False)
    out = jax.block_until_ready(out)
    ref = x + pe_table[:SEQ][:, None, :]
    np.testing.assert_allclose(np.asarray(out), np.asarray(ref), rtol=1e-6, atol=1e-6)

    # --- Training-mode forward (inverted dropout); mask reproducible from the key ---
    p = 0.1
    out_tr = positional_encoding(x, pe_table, dropout_p=p, training=True, rng_key=kdrop)
    out_tr = jax.block_until_ready(out_tr)

    bits = jax.random.bits(kdrop, (SEQ * BATCH, D_MODEL), dtype=jnp.uint32)
    bits = np.asarray(bits).reshape(SEQ, BATCH, D_MODEL)
    thr = np.uint32(min(int(round(p * 4294967296.0)), 4294967295))
    keep = bits >= thr
    scale = np.float32(1.0 / (1.0 - p))
    ref_tr = np.where(keep, np.asarray(ref, dtype=np.float32) * scale, np.float32(0.0))
    np.testing.assert_allclose(np.asarray(out_tr), ref_tr, rtol=1e-5, atol=1e-5)

    print("KERNEL_OK")
</pallas_src>

<mosaic_0001>
module attributes {stable_mosaic.version = 11 : i64} {
  func.func @_pe_add_kernel(%arg0: i32, %arg1: memref<16x32xf32, #tpu.memory_space<vmem>>, %arg2: memref<16x32xf32, #tpu.memory_space<vmem>>, %arg3: memref<16x32xf32, #tpu.memory_space<vmem>>) attributes {dimension_semantics = [#tpu.dimension_semantics<arbitrary>], iteration_bounds = array<i64: 1>, scalar_prefetch = 0 : i64, scratch_operands = 0 : i64, tpu.core_type = #tpu.core_type<tc>, window_params = [{transform_indices = @transform_0, window_bounds = array<i64: 16, 32>}, {transform_indices = @transform_1, window_bounds = array<i64: 16, 32>}, {transform_indices = @transform_2, window_bounds = array<i64: 16, 32>}]} {
    %c0 = arith.constant 0 : index
    %c0_0 = arith.constant 0 : index
    %0 = vector.load %arg1[%c0, %c0_0] : memref<16x32xf32, #tpu.memory_space<vmem>>, vector<16x32xf32>
    %c0_1 = arith.constant 0 : index
    %c0_2 = arith.constant 0 : index
    %1 = vector.load %arg2[%c0_1, %c0_2] : memref<16x32xf32, #tpu.memory_space<vmem>>, vector<16x32xf32>
    %2 = arith.addf %0, %1 : vector<16x32xf32>
    %c0_3 = arith.constant 0 : index
    %c0_4 = arith.constant 0 : index
    %3 = vector.load %arg3[%c0_3, %c0_4] : memref<16x32xf32, #tpu.memory_space<vmem>>, vector<16x32xf32>
    tpu.vector_store %arg3[%c0_3, %c0_4], %2 {strides = array<i32>} : memref<16x32xf32, #tpu.memory_space<vmem>>, vector<16x32xf32>,
    return
  }
  func.func @transform_0(%arg0: i32) -> (i32, i32) {
    %c0_i32 = arith.constant 0 : i32
    %c0_i32_0 = arith.constant 0 : i32
    return %arg0, %c0_i32 : i32, i32
  }
  func.func @transform_1(%arg0: i32) -> (i32, i32) {
    %c0_i32 = arith.constant 0 : i32
    %c0_i32_0 = arith.constant 0 : i32
    return %arg0, %c0_i32 : i32, i32
  }
  func.func @transform_2(%arg0: i32) -> (i32, i32) {
    %c0_i32 = arith.constant 0 : i32
    %c0_i32_0 = arith.constant 0 : i32
    return %arg0, %c0_i32 : i32, i32
  }
}

</mosaic_0001>

<llo_original>
// kernel: tpu_custom_call.1
$region0: #{tpu_custom_call.1}
  #allocation0 [shape = 'u32[]', space=smem, size = 0x4, offset = 0x4, fixed_abs, tag = 'smem constant byte address 0x4 - core index']
  #allocation1 [shape = 'u32[144,128]{1,0:T(1,128)}', space=vmem, size = 0x12000, scoped, tag = 'internal scratch']
  %s0 = inlined_call_operand.hbm [shape: f32[16,32], index: 0, kind: input, shape index: {}]
  %s1 = inlined_call_operand.hbm [shape: f32[16,32], index: 1, kind: input, shape index: {}]
  %s2 = inlined_call_operand.hbm [shape: f32[16,32], index: 2, kind: output, shape index: {}]
  %s3 = sld [smem:[#allocation0]]
  $region26: #{tpu_custom_call.1} parent=0
    _
  %s5 = ssub.s32 1, %s3
  %s6 = scalar_select 0, %s5, %s3
  $region1: #{tpu_custom_call.1} parent=0
    #allocation2 [shape = 'u8[8192]{0}', space=vmem, size = 0x2000, scoped, tag = 'input window, operand 0, single buffered']
    #allocation3 [shape = 's32[1]{0}', space=sflag, size = 0x4, scoped, tag = 'scoped memory for tpu_custom_call.1']
    #allocation4 [shape = 's32[1]{0}', space=sflag, size = 0x4, scoped, tag = 'scoped memory for tpu_custom_call.1']
    #allocation5 [shape = 'u8[8192]{0}', space=vmem, size = 0x2000, scoped, tag = 'input window, operand 1, single buffered']
    #allocation6 [shape = 's32[1]{0}', space=sflag, size = 0x4, scoped, tag = 'scoped memory for tpu_custom_call.1']
    #allocation7 [shape = 'u8[8192]{0}', space=vmem, size = 0x2000, scoped, tag = 'output window, operand 0, single buffered']
    %7 = vsyncpa [#allocation3], 0
    %8 = vsyncpa [#allocation6], 0
    %9 = vsyncpa [#allocation4], 0
    // Predicated region
    $region2: #{tpu_custom_call.1} parent=1 // pred_check
      _
    $region3: #{tpu_custom_call.1} parent=1 // pred_check_branch
      %11 = sbr.rel (0) target = $region5
    $region4: #{tpu_custom_call.1} parent=1 // pred_region
      %s13 = ssub.s32 256, 256
      %14 = vsyncadd [#allocation3], %s13
      %s15 = sshll.u32 [#allocation2], 4
      %s16 = int_to_ptr.vmem [resolvable:$true] %s15
      %21 = dma.hbm_to_vmem [thread:$0]  %s0, 256, %s16, [#allocation3], 128, 128, 8
    $region5: #{tpu_custom_call.1} parent=1 // pred_fallthru
      _
    // Predicated region
    $region6: #{tpu_custom_call.1} parent=1 // pred_check
      _
    $region7: #{tpu_custom_call.1} parent=1 // pred_check_branch
      %23 = sbr.rel (0) target = $region9
    $region8: #{tpu_custom_call.1} parent=1 // pred_region
      %s25 = ssub.s32 256, 256
      %26 = vsyncadd [#allocation6], %s25
      %s27 = sshll.u32 [#allocation5], 4
      %s28 = int_to_ptr.vmem [resolvable:$true] %s27
      %33 = dma.hbm_to_vmem [thread:$0]  %s1, 256, %s28, [#allocation6], 128, 128, 8
    $region9: #{tpu_custom_call.1} parent=1 // pred_fallthru
      _
    // Predicated region
    $region10: #{tpu_custom_call.1} parent=1 // pred_check
      _
    $region11: #{tpu_custom_call.1} parent=1 // pred_check_branch
      %35 = sbr.rel (0) target = $region13
    $region12: #{tpu_custom_call.1} parent=1 // pred_region
      %36 = dma.done [#allocation3], 256
    $region13: #{tpu_custom_call.1} parent=1 // pred_fallthru
      _
    // Predicated region
    $region14: #{tpu_custom_call.1} parent=1 // pred_check
      _
    $region15: #{tpu_custom_call.1} parent=1 // pred_check_branch
      %38 = sbr.rel (0) target = $region17
    $region16: #{tpu_custom_call.1} parent=1 // pred_region
      %39 = dma.done [#allocation6], 256
    $region17: #{tpu_custom_call.1} parent=1 // pred_fallthru
      _
    %v40 = vld [vmem:[#allocation2] sm:$0xff]
    %v41 = vld [vmem:[#allocation2 + $0x8] sm:$0xff]
    %v42 = vld [vmem:[#allocation5] sm:$0xff]
    %v43 = vld [vmem:[#allocation5 + $0x8] sm:$0xff]
    %v44 = vadd.f32 %v40, %v42
    %v45 = vadd.f32 %v41, %v43
    %vm46 = vcmask 261120
    %47 = vst.msk [vmem:[#allocation7] sm:$0xff] %vm46, %v44
    %48 = vst.msk [vmem:[#allocation7 + $0x8] sm:$0xff] %vm46, %v45
    // Predicated region
    $region18: #{tpu_custom_call.1} parent=1 // pred_check
      _
    $region19: #{tpu_custom_call.1} parent=1 // pred_check_branch
      %50 = sbr.rel (0) target = $region21
    $region20: #{tpu_custom_call.1} parent=1 // pred_region
      %s52 = ssub.s32 256, 256
      %53 = vsyncadd [#allocation4], %s52
      %s54 = sshll.u32 [#allocation7], 4
      %s55 = int_to_ptr.vmem [resolvable:$true] %s54
      %60 = dma.vmem_to_hbm [thread:$0]  %s55, 256, %s2, [#allocation4], 128, 128, 8
    $region21: #{tpu_custom_call.1} parent=1 // pred_fallthru
      _
    // Predicated region
    $region22: #{tpu_custom_call.1} parent=1 // pred_check
      _
    $region23: #{tpu_custom_call.1} parent=1 // pred_check_branch
      %62 = sbr.rel (0) target = $region25
    $region24: #{tpu_custom_call.1} parent=1 // pred_region
      %63 = dma.done [#allocation4], 256
    $region25: #{tpu_custom_call.1} parent=1 // pred_fallthru
      _
    %64 = vsyncpa [#allocation3], 1
    %65 = vsyncpa [#allocation6], 1
    %66 = vsyncpa [#allocation4], 1

</llo_original>
